<compile_context>
chip_gen: v5e
topology: v5e:2x2
jax: 0.10.0
libtpu: 0.0.40
codegen_flags: <defaults>
</compile_context>

<pallas_src>
import functools

import jax
import jax.numpy as jnp
from jax.experimental import pallas as pl
from jax.experimental.pallas import tpu as pltpu

_LANE = 128
_SUBLANE = 8
_MAX_TB = 8
_TARGET_TILE_BYTES = 16 * 1024 * 1024     # per feature tile (double-buffered by the pipeline)
_MASK_LANE_BYTES = _LANE * 4              # VMEM bytes per mask element in a (TB, TS, 1) f32 block


def _vmem_limit_bytes():
    """Generation-aware scoped-VMEM limit (v5e/v6e: 128 MiB phys, v7x: 64 MiB)."""
    try:
        cap = pltpu.get_tpu_info().vmem_capacity_bytes
    except Exception:                      # conservative fallback (v7x-sized)
        cap = 64 * 1024 * 1024
    return int(min(cap * 3 // 4, 96 * 1024 * 1024))


def _pick_tiles(B, S, H, itemsize, vmem_limit, masked):
    """Choose (TB, nb, TH, nh, TS, ns) obeying the (8,128) block constraints.

    * TB: up to 8 rows per block so the output store is a dense (TB, TH) slab.
    * TH: lane-aligned hidden tile; split to >= 2 blocks when the batch axis
      alone cannot give a parallel grid extent >= 2 (v7x has 2 TensorCores).
    * TS: fills a ~16 MiB feature tile (counting the padded mask block when
      masked, so the double-buffered working set fits the VMEM budget).
    """
    TB = B if B <= _MAX_TB else _MAX_TB
    nb = pl.cdiv(B, TB)

    if H % _LANE == 0:
        TH = min(H, 1024)
        if nb == 1 and H >= 2 * _LANE and pl.cdiv(H, TH) < 2:
            # Give the second TensorCore (v7x) its own parallel hidden block.
            TH = max(_LANE, ((H // 2) // _LANE) * _LANE)
    else:
        TH = H                               # block dim == full dim is always legal
    nh = pl.cdiv(H, TH)

    tile_budget = min(_TARGET_TILE_BYTES, vmem_limit // 3)
    per_elem = TB * (TH * itemsize + (_MASK_LANE_BYTES if masked else 0))
    ts_cap = max(_SUBLANE, tile_budget // max(1, per_elem))
    TS = S if ts_cap >= S else max(_SUBLANE, (ts_cap // _SUBLANE) * _SUBLANE)
    ns = pl.cdiv(S, TS)
    return TB, nb, TH, nh, TS, ns


def _mean_kernel(feat_ref, out_ref, acc_ref, *, inv_s, ts, s_tail):
    # feat_ref: (TB, TS, TH)   out_ref: (TB, TH)   acc_ref: (TB, TH) f32 scratch
    s = pl.program_id(2)

    @pl.when(s == 0)
    def _init():
        acc_ref[...] = jnp.zeros_like(acc_ref)

    x = feat_ref[...].astype(jnp.float32)
    if s_tail:  # static: S % TS != 0 -> mask the out-of-bounds seq tail (garbage reads)
        n_valid = jnp.where(s == pl.num_programs(2) - 1, s_tail, ts)
        valid = jax.lax.broadcasted_iota(jnp.int32, x.shape, 1) < n_valid
        x = jnp.where(valid, x, 0.0)
    acc_ref[...] += jnp.sum(x, axis=1)

    @pl.when(s == pl.num_programs(2) - 1)
    def _finalize():
        out_ref[...] = (acc_ref[...] * inv_s).astype(out_ref.dtype)


def _masked_mean_kernel(feat_ref, mask_ref, invd_ref, out_ref, acc_ref):
    # feat_ref: (TB, TS, TH)  mask_ref: (TB, TS, 1)  invd_ref: (TB, 1)
    # out_ref:  (TB, TH)      acc_ref:  (TB, TH) f32 scratch
    s = pl.program_id(2)

    @pl.when(s == 0)
    def _init():
        acc_ref[...] = jnp.zeros_like(acc_ref)

    x = feat_ref[...].astype(jnp.float32)
    keep = mask_ref[...] != 0.0              # (TB, TS, 1); zero-padded past S, so
    # where() (not multiply) also kills any NaN/Inf garbage in the OOB seq tail.
    acc_ref[...] += jnp.sum(jnp.where(keep, x, 0.0), axis=1)

    @pl.when(s == pl.num_programs(2) - 1)
    def _finalize():
        out_ref[...] = (acc_ref[...] * invd_ref[...]).astype(out_ref.dtype)


def mean_pooling(features, input_mask=None):
    """Pallas implementation of MeanPooling.forward.

    features: [B, S, H] float array
    input_mask: optional [B, S] (0/1) mask
    returns: [B, H]
    """
    B, S, H = features.shape
    itemsize = jnp.dtype(features.dtype).itemsize
    vmem_limit = _vmem_limit_bytes()
    masked = input_mask is not None
    TB, nb, TH, nh, TS, ns = _pick_tiles(B, S, H, itemsize, vmem_limit, masked)

    cparams = pltpu.CompilerParams(
        dimension_semantics=("parallel", "parallel", "arbitrary"),
        vmem_limit_bytes=vmem_limit)
    cost = pl.CostEstimate(
        flops=2 * B * S * H,
        transcendentals=0,
        bytes_accessed=B * S * H * itemsize + B * S * 4 + B * H * itemsize)

    feat_spec = pl.BlockSpec((TB, TS, TH), lambda b, h, s: (b, s, h))
    out_spec = pl.BlockSpec((TB, TH), lambda b, h, s: (b, h))
    out_shape = jax.ShapeDtypeStruct((B, H), features.dtype)
    scratch = [pltpu.VMEM((TB, TH), jnp.float32)]

    if not masked:
        kernel = functools.partial(_mean_kernel, inv_s=1.0 / S, ts=TS, s_tail=S % TS)
        return pl.pallas_call(
            kernel,
            out_shape=out_shape,
            grid_spec=pltpu.PrefetchScalarGridSpec(
                num_scalar_prefetch=0,
                grid=(nb, nh, ns),
                in_specs=[feat_spec],
                out_specs=out_spec,
                scratch_shapes=scratch),
            compiler_params=cparams,
            cost_estimate=cost,
        )(features)

    # Masked path: tiny [B, S] mask is the only thing we pad / reshape.
    mask = input_mask.astype(jnp.float32)
    # 1/denominator precomputed on B scalars; clamp avoids NaN on fully-masked
    # rows (intentional divergence from a literal 0/0 in the PyTorch reference).
    inv_denom = 1.0 / jnp.maximum(jnp.sum(mask, axis=1, keepdims=True), 1e-9)
    mask3 = mask[:, :, None]                 # (B, S, 1): S on sublanes for a VPU broadcast
    Sp = ns * TS
    if Sp != S:
        mask3 = jnp.pad(mask3, ((0, 0), (0, Sp - S), (0, 0)))

    return pl.pallas_call(
        _masked_mean_kernel,
        out_shape=out_shape,
        grid_spec=pltpu.PrefetchScalarGridSpec(
            num_scalar_prefetch=0,
            grid=(nb, nh, ns),
            in_specs=[
                feat_spec,
                pl.BlockSpec((TB, TS, 1), lambda b, h, s: (b, s, 0)),
                pl.BlockSpec((TB, 1), lambda b, h, s: (b, 0)),
            ],
            out_specs=out_spec,
            scratch_shapes=scratch),
        compiler_params=cparams,
        cost_estimate=cost,
    )(features, mask3, inv_denom)


def _reference(features, input_mask=None):
    if input_mask is None:
        return jnp.mean(features, axis=1)
    m = input_mask.astype(features.dtype)[:, :, None]
    return jnp.sum(features * m, axis=1) / jnp.sum(m, axis=1)


if __name__ == "__main__":
    key = jax.random.PRNGKey(0)
    k1, k2, k3, k4, k5, k6 = jax.random.split(key, 6)

    # --- small shape matching the module's (batch, seq, hidden) convention ---
    B, S, H = 2, 8, 32
    feats = jax.random.normal(k1, (B, S, H), dtype=jnp.float32)
    mask_a = (jax.random.uniform(k2, (B, S)) > 0.3).astype(jnp.float32)
    mask_a = mask_a.at[:, 0].set(1.0)           # no fully-masked rows
    out_m = jax.block_until_ready(mean_pooling(feats, mask_a))
    out_p = jax.block_until_ready(mean_pooling(feats))
    assert out_m.shape == (B, H) and out_p.shape == (B, H)
    assert jnp.allclose(out_m, _reference(feats, mask_a), atol=1e-5, rtol=1e-5)
    assert jnp.allclose(out_p, _reference(feats), atol=1e-5, rtol=1e-5)

    # --- ragged batch blocks (B=10 -> TB=8) with NO feature padding ---
    B2, S2, H2 = 10, 1000, 256
    feats2 = jax.random.normal(k3, (B2, S2, H2), dtype=jnp.float32)
    mask_b = (jax.random.uniform(k4, (B2, S2)) > 0.5).astype(jnp.float32)
    mask_b = mask_b.at[:, 0].set(1.0)
    out2_m = jax.block_until_ready(mean_pooling(feats2, mask_b))
    out2_p = jax.block_until_ready(mean_pooling(feats2))
    assert jnp.allclose(out2_m, _reference(feats2, mask_b), atol=1e-4, rtol=1e-4)
    assert jnp.allclose(out2_p, _reference(feats2), atol=1e-4, rtol=1e-4)

    # --- long sequence: exercises seq tiling with a ragged last tile and the
    #     forced hidden split (nb == 1 -> nh >= 2 so both v7x cores get work) ---
    B3, S3, H3 = 4, 5000, 512
    feats3 = jax.random.normal(k5, (B3, S3, H3), dtype=jnp.float32)
    mask_c = (jax.random.uniform(k6, (B3, S3)) > 0.5).astype(jnp.float32)
    mask_c = mask_c.at[:, 0].set(1.0)
    out3_m = jax.block_until_ready(mean_pooling(feats3, mask_c))
    out3_p = jax.block_until_ready(mean_pooling(feats3))
    assert jnp.allclose(out3_m, _reference(feats3, mask_c), atol=1e-4, rtol=1e-4)
    assert jnp.allclose(out3_p, _reference(feats3), atol=1e-4, rtol=1e-4)

    print("KERNEL_OK")
</pallas_src>

<mosaic_0001>
module attributes {stable_mosaic.version = 11 : i64} {
  func.func @_masked_mean_kernel(%arg0: i32, %arg1: i32, %arg2: i32, %arg3: memref<2x8x32xf32, #tpu.memory_space<vmem>>, %arg4: memref<2x8x1xf32, #tpu.memory_space<vmem>>, %arg5: memref<2x1xf32, #tpu.memory_space<vmem>>, %arg6: memref<2x32xf32, #tpu.memory_space<vmem>>, %arg7: memref<2x32xf32, #tpu.memory_space<vmem>>) attributes {dimension_semantics = [#tpu.dimension_semantics<parallel>, #tpu.dimension_semantics<parallel>, #tpu.dimension_semantics<arbitrary>], iteration_bounds = array<i64: 1, 1, 1>, scalar_prefetch = 0 : i64, scratch_operands = 1 : i64, tpu.core_type = #tpu.core_type<tc>, window_params = [{transform_indices = @transform_0, window_bounds = array<i64: 2, 8, 32>}, {transform_indices = @transform_1, window_bounds = array<i64: 2, 8, 1>}, {transform_indices = @transform_2, window_bounds = array<i64: 2, 1>}, {transform_indices = @transform_3, window_bounds = array<i64: 2, 32>}]} {
    %c0_i32 = arith.constant 0 : i32
    %0 = arith.cmpi eq, %arg2, %c0_i32 : i32
    %1 = arith.extui %0 : i1 to i32
    %c0_i32_0 = arith.constant 0 : i32
    %2 = arith.cmpi ne, %1, %c0_i32_0 : i32
    scf.if %2 {
      %cst_14 = arith.constant 0.000000e+00 : f32
      %18 = vector.broadcast %cst_14 : f32 to vector<2x32xf32>
      %c0_15 = arith.constant 0 : index
      %c0_16 = arith.constant 0 : index
      %19 = vector.load %arg7[%c0_15, %c0_16] : memref<2x32xf32, #tpu.memory_space<vmem>>, vector<2x32xf32>
      tpu.vector_store %arg7[%c0_15, %c0_16], %18 {strides = array<i32>} : memref<2x32xf32, #tpu.memory_space<vmem>>, vector<2x32xf32>,
    } else {
    }
    %c0 = arith.constant 0 : index
    %c0_1 = arith.constant 0 : index
    %c0_2 = arith.constant 0 : index
    %3 = vector.load %arg3[%c0, %c0_1, %c0_2] : memref<2x8x32xf32, #tpu.memory_space<vmem>>, vector<2x8x32xf32>
    %c0_3 = arith.constant 0 : index
    %c0_4 = arith.constant 0 : index
    %c0_5 = arith.constant 0 : index
    %4 = vector.load %arg4[%c0_3, %c0_4, %c0_5] : memref<2x8x1xf32, #tpu.memory_space<vmem>>, vector<2x8x1xf32>
    %cst = arith.constant 0.000000e+00 : f32
    %5 = vector.broadcast %cst : f32 to vector<2x8x1xf32>
    %6 = arith.cmpf one, %4, %5 : vector<2x8x1xf32>
    %c0_6 = arith.constant 0 : index
    %c0_7 = arith.constant 0 : index
    %7 = vector.load %arg7[%c0_6, %c0_7] : memref<2x32xf32, #tpu.memory_space<vmem>>, vector<2x32xf32>
    %cst_8 = arith.constant 0.000000e+00 : f32
    %8 = vector.shape_cast %6 : vector<2x8x1xi1> to vector<2x8x1xi1>
    %9 = vector.broadcast %8 : vector<2x8x1xi1> to vector<2x8x32xi1>
    %10 = vector.broadcast %cst_8 : f32 to vector<2x8x32xf32>
    %11 = arith.select %9, %3, %10 : vector<2x8x32xi1>, vector<2x8x32xf32>
    %cst_9 = arith.constant dense<0.000000e+00> : vector<2x32xf32>
    %12 = vector.multi_reduction <add>, %11, %cst_9 [1] : vector<2x8x32xf32> to vector<2x32xf32>
    %13 = arith.addf %7, %12 : vector<2x32xf32>
    %c0_10 = arith.constant 0 : index
    %c0_11 = arith.constant 0 : index
    %14 = vector.load %arg7[%c0_10, %c0_11] : memref<2x32xf32, #tpu.memory_space<vmem>>, vector<2x32xf32>
    tpu.vector_store %arg7[%c0_10, %c0_11], %13 {strides = array<i32>} : memref<2x32xf32, #tpu.memory_space<vmem>>, vector<2x32xf32>,
    %c0_i32_12 = arith.constant 0 : i32
    %15 = arith.cmpi eq, %arg2, %c0_i32_12 : i32
    %16 = arith.extui %15 : i1 to i32
    %c0_i32_13 = arith.constant 0 : i32
    %17 = arith.cmpi ne, %16, %c0_i32_13 : i32
    scf.if %17 {
      %c0_14 = arith.constant 0 : index
      %c0_15 = arith.constant 0 : index
      %18 = vector.load %arg7[%c0_14, %c0_15] : memref<2x32xf32, #tpu.memory_space<vmem>>, vector<2x32xf32>
      %c0_16 = arith.constant 0 : index
      %c0_17 = arith.constant 0 : index
      %19 = vector.load %arg5[%c0_16, %c0_17] : memref<2x1xf32, #tpu.memory_space<vmem>>, vector<2x1xf32>
      %20 = vector.broadcast %19 : vector<2x1xf32> to vector<2x32xf32>
      %21 = arith.mulf %18, %20 : vector<2x32xf32>
      %c0_18 = arith.constant 0 : index
      %c0_19 = arith.constant 0 : index
      %22 = vector.load %arg6[%c0_18, %c0_19] : memref<2x32xf32, #tpu.memory_space<vmem>>, vector<2x32xf32>
      tpu.vector_store %arg6[%c0_18, %c0_19], %21 {strides = array<i32>} : memref<2x32xf32, #tpu.memory_space<vmem>>, vector<2x32xf32>,
    } else {
    }
    return
  }
  func.func @transform_0(%arg0: i32, %arg1: i32, %arg2: i32) -> (i32, i32, i32) {
    %c0_i32 = arith.constant 0 : i32
    return %arg0, %arg2, %arg1 : i32, i32, i32
  }
  func.func @transform_1(%arg0: i32, %arg1: i32, %arg2: i32) -> (i32, i32, i32) {
    %c0_i32 = arith.constant 0 : i32
    %c0_i32_0 = arith.constant 0 : i32
    return %arg0, %arg2, %c0_i32 : i32, i32, i32
  }
  func.func @transform_2(%arg0: i32, %arg1: i32, %arg2: i32) -> (i32, i32) {
    %c0_i32 = arith.constant 0 : i32
    %c0_i32_0 = arith.constant 0 : i32
    return %arg0, %c0_i32 : i32, i32
  }
  func.func @transform_3(%arg0: i32, %arg1: i32, %arg2: i32) -> (i32, i32) {
    %c0_i32 = arith.constant 0 : i32
    return %arg0, %arg1 : i32, i32
  }
}

</mosaic_0001>

<llo_original>
// kernel: tpu_custom_call.1
$region0: #{tpu_custom_call.1}
  #allocation0 [shape = 'u32[]', space=smem, size = 0x4, offset = 0x4, fixed_abs, tag = 'smem constant byte address 0x4 - core index']
  #allocation1 [shape = 'u32[72,128]{1,0:T(1,128)}', space=vmem, size = 0x9000, scoped, tag = 'internal scratch']
  #allocation2 [shape = 'f32[2,32]{1,0:T(2,128)}', space=vmem, size = 0x400, scoped, tag = 'scratch operand']
  %s0 = inlined_call_operand.vmem [shape: f32[2,8,32], index: 0, kind: input, shape index: {}]
  %s1 = inlined_call_operand.vmem [shape: f32[2,8,1], index: 1, kind: input, shape index: {}]
  %s2 = inlined_call_operand.vmem [shape: f32[2,1], index: 2, kind: input, shape index: {}]
  %s3 = inlined_call_operand.hbm [shape: f32[2,32], index: 3, kind: output, shape index: {}]
  %s4 = sld [smem:[#allocation0]]
  $region30: #{tpu_custom_call.1} parent=0
    _
  %s6 = ssub.s32 1, %s4
  %s7 = scalar_select 0, %s6, %s4
  $region1: #{tpu_custom_call.1} parent=0
    #allocation3 [shape = 'u8[1024]{0}', space=vmem, size = 0x400, scoped, tag = 'output window, operand 0, single buffered']
    #allocation4 [shape = 's32[1]{0}', space=sflag, size = 0x4, scoped, tag = 'scoped memory for tpu_custom_call.1']
    %8 = vsyncpa [#allocation4], 0
    // Predicated region
    $region2: #{tpu_custom_call.1} parent=1 // pred_check
      _
    $region3: #{tpu_custom_call.1} parent=1 // pred_check_branch
      %10 = sbr.rel (0) target = $region5
    $region4: #{tpu_custom_call.1} parent=1 // pred_region
      _
    $region5: #{tpu_custom_call.1} parent=1 // pred_fallthru
      _
    // Predicated region
    $region6: #{tpu_custom_call.1} parent=1 // pred_check
      _
    $region7: #{tpu_custom_call.1} parent=1 // pred_check_branch
      %12 = sbr.rel (0) target = $region9
    $region8: #{tpu_custom_call.1} parent=1 // pred_region
      _
    $region9: #{tpu_custom_call.1} parent=1 // pred_fallthru
      _
    // Predicated region
    $region10: #{tpu_custom_call.1} parent=1 // pred_check
      _
    $region11: #{tpu_custom_call.1} parent=1 // pred_check_branch
      %14 = sbr.rel (0) target = $region13
    $region12: #{tpu_custom_call.1} parent=1 // pred_region
      _
    $region13: #{tpu_custom_call.1} parent=1 // pred_fallthru
      _
    %p15 = scmp.eq.s32.totalorder 0, 0
    // Predicated region
    $region14: #{tpu_custom_call.1} parent=1 // pred_check
      %p16 = pneg %p15
    $region15: #{tpu_custom_call.1} parent=1 // pred_check_branch
      %18 = sbr.rel (%p16) target = $region17
    $region16: #{tpu_custom_call.1} parent=1 // pred_region
      %vm19 = vcmask 254976
      %20 = vst.msk [vmem:[#allocation2] sm:$0x3] %vm19, 0.0
    $region17: #{tpu_custom_call.1} parent=1 // pred_fallthru
      _
    %v21 = vld [vmem:[%s0] sm:$0xff]
    %v22 = vld [vmem:[%s0 + $0x8] sm:$0xff]
    %v23 = vld [vmem:[%s1] sm:$0xff]
    %v24 = vld [vmem:[%s1 + $0x8] sm:$0xff]
    %vm25 = vcmp.ne.f32.partialorder %v23, 0.0
    %vm26 = vcmp.ne.f32.partialorder %v24, 0.0
    %v27 = vld [vmem:[#allocation2] sm:$0x3]
    %v28 = vsel %vm25, 1, 0
    %v29 = vsel %vm26, 1, 0
    %30 = vset.pattern.permute.xlu0 0
    %31 = vperm.xlu0 %30, %v28
    %v32 = vpop.permute.xlu0 %31
    %33 = vset.pattern.permute.xlu0 0
    %34 = vperm.xlu0 %33, %v29
    %v35 = vpop.permute.xlu0 %34
    %vm36 = vcmp.eq.s32.totalorder %v32, 1
    %vm37 = vcmp.eq.s32.totalorder %v35, 1
    %v38 = vsel %vm36, %v21, 0.0
    %v39 = vsel %vm37, %v22, 0.0
    %vm40 = vcmask 261120
    %v41 = vsel %vm40, %v38, 0.0
    %v42 = vrot.slane %v41, 4
    %v43 = vadd.f32 %v41, %v42
    %v44 = vrot.slane %v43, 2
    %v45 = vadd.f32 %v43, %v44
    %v46 = vrot.slane %v45, 1
    %v47 = vadd.f32 %v45, %v46
    %v48 = vsel %vm40, %v39, 0.0
    %v49 = vrot.slane %v48, 4
    %v50 = vadd.f32 %v48, %v49
    %v51 = vrot.slane %v50, 2
    %v52 = vadd.f32 %v50, %v51
    %v53 = vrot.slane %v52, 1
    %v54 = vadd.f32 %v52, %v53
    %vm57 = vcmask 1041409
    %v58 = vsel %vm57, %v54, %v47
    %v60 = vadd.f32 %v27, %v58
    %vm61 = vcmask 254976
    %62 = vst.msk [vmem:[#allocation2] sm:$0x3] %vm61, %v60
    // Predicated region
    $region18: #{tpu_custom_call.1} parent=1 // pred_check
      %p63 = pneg %p15
    $region19: #{tpu_custom_call.1} parent=1 // pred_check_branch
      %65 = sbr.rel (%p63) target = $region21
    $region20: #{tpu_custom_call.1} parent=1 // pred_region
      %v66 = vld [vmem:[#allocation2] sm:$0x3]
      %v67 = vld [vmem:[%s2] sm:$0x3]
      %69 = vset.pattern.permute.xlu0 0
      %70 = vperm.xlu0 %69, %v67
      %v71 = vpop.permute.xlu0 %70
      %v73 = vmul.f32 %v66, %v71
      %74 = vst.msk [vmem:[#allocation3] sm:$0x3] %vm61, %v73
    $region21: #{tpu_custom_call.1} parent=1 // pred_fallthru
      _
    // Predicated region
    $region22: #{tpu_custom_call.1} parent=1 // pred_check
      _
    $region23: #{tpu_custom_call.1} parent=1 // pred_check_branch
      %76 = sbr.rel (0) target = $region25
    $region24: #{tpu_custom_call.1} parent=1 // pred_region
      %78 = vsyncadd [#allocation4], 0
      %s80 = sshll.u32 [#allocation3], 4
      %s81 = int_to_ptr.vmem [resolvable:$true] %s80
      %s82 = sshll.u32 %s3, 4
      %s83 = int_to_ptr.hbm [resolvable:$true] %s82
      %85 = dma.vmem_to_hbm [thread:$0]  %s81, 32, %s83, [#allocation4]
    $region25: #{tpu_custom_call.1} parent=1 // pred_fallthru
      _
    // Predicated region
    $region26: #{tpu_custom_call.1} parent=1 // pred_check
      _
    $region27: #{tpu_custom_call.1} parent=1 // pred_check_branch
      %87 = sbr.rel (0) target = $region29
    $region28: #{tpu_custom_call.1} parent=1 // pred_region
      %89 = dma.done [#allocation4], 32
    $region29: #{tpu_custom_call.1} parent=1 // pred_fallthru
      _
    %90 = vsyncpa [#allocation4], 1

</llo_original>
